<compile_context>
chip_gen: v7x
topology: tpu7x:2x2x1
jax: 0.10.0
libtpu: 0.0.40
codegen_flags: <defaults>
</compile_context>

<pallas_src>
import jax
import jax.numpy as jnp
import numpy as np
from jax.experimental import pallas as pl
from jax.experimental.pallas import tpu as pltpu

_SUBLANE = 8
# Conservative tile budget: fits v7x's ~32 MiB scoped / 64 MiB physical VMEM with
# headroom, and is well inside v5e/v6e's 128 MiB.
_VMEM_TILE_BUDGET = 24 * 1024 * 1024


def _round_up(x: int, m: int) -> int:
    return -(-x // m) * m


# --------------------------------------------------------------------------- kernel


def _attention_kernel(hid_ref, enc_ref, wh_ref, we_ref, b_ref, v_ref, out_ref):
    """One grid step == one tile of `bt` batch rows.

    hid_ref : (bt, Hd)      bf16 decoder hidden states for this batch tile
    enc_ref : (bt*S, He)    bf16 encoder outputs for this batch tile (lane-dense 2D)
    wh_ref  : (Hd, Hd)      bf16 attn weight rows belonging to `hidden` (transposed)
    we_ref  : (He, Hd)      bf16 attn weight rows belonging to `encoder_outputs`
    b_ref   : (1, Hd)       f32 attn bias
    v_ref   : (1, Hd)       f32 v weight as a row vector (no bias)
    out_ref : (bt, S)       f32 softmax attention weights (S on the lane axis)
    """
    bt, S = out_ref.shape
    Hd = wh_ref.shape[1]

    # Hidden projection: one (bt, Hd) @ (Hd, Hd) bf16 MXU matmul, f32 accumulate.
    hp = jnp.dot(hid_ref[...], wh_ref[...],
                 preferred_element_type=jnp.float32) + b_ref[...]            # (bt, Hd)

    # Encoder projection: one (bt*S, He) @ (He, Hd) bf16 MXU matmul, f32 accumulate.
    e_flat = jnp.dot(enc_ref[...], we_ref[...],
                     preferred_element_type=jnp.float32)                     # (bt*S, Hd)

    # tanh (EUP) over the energy tensor; S a multiple of 8 keeps this reshape
    # tile-aligned (no relayout copy).
    energy = jnp.tanh(e_flat.reshape(bt, S, Hd) + hp[:, None, :])            # (bt, S, Hd)

    # v(energy): VPU multiply + lane reduction -> lane-dense (bt, S) score.
    score = jnp.sum(energy * v_ref[...], axis=-1)                            # (bt, S)

    # Softmax over the sequence (dim=1 in the PyTorch module), along the lane axis.
    # Exact divide (denominator is only (bt,1)) so rows sum to 1 exactly.
    m = jnp.max(score, axis=-1, keepdims=True)
    ex = jnp.exp(score - m)
    probs = ex / jnp.sum(ex, axis=-1, keepdims=True)

    out_ref[...] = probs.astype(out_ref.dtype)


# ------------------------------------------------------------------- tiling / VMEM plan


def _tile_plan(B: int, S: int, He: int, Hd: int):
    """Return (padded batch Bp, batch tile bt, vmem_limit_bytes)."""
    Bp = _round_up(max(B, 1), _SUBLANE)

    # Bytes of VMEM needed per batch row of one pipelined grid step.
    per_row = (
        2 * 2 * S * He      # double-buffered bf16 encoder block
        + 2 * 2 * Hd        # double-buffered bf16 hidden block
        + 2 * 4 * S * Hd    # live f32 intermediates: e_flat + energy
        + 4 * 4 * S         # f32 score/exp/probs + double-buffered f32 output block
        + 2 * 4 * Hd        # f32 hidden projection + slack
    )
    # Constant operands (counted double-buffered so the fallback path also fits).
    weight_bytes = 2 * Hd * (Hd + He) + 2 * 4 * Hd

    budget = max(_VMEM_TILE_BUDGET - 2 * weight_bytes, _SUBLANE * per_row)
    max_bt = max(_SUBLANE, budget // per_row)
    # TODO(synk): for very large S (per_row > budget even at bt=8) add a sequence grid
    # axis ("arbitrary", last) with a flash-style online softmax in VMEM scratch instead
    # of materializing the full (bt, S, Hd) energy tensor.

    cap = max_bt
    if Bp >= 2 * _SUBLANE:
        # >= 2 parallel grid steps so both v7x TensorCores get work.
        cap = min(cap, Bp // 2)

    bt = _SUBLANE                           # 8 always divides Bp
    d = _SUBLANE
    limit = min(cap, Bp)
    while d <= limit:
        if Bp % d == 0:
            bt = d
        d += _SUBLANE

    total_est = 2 * weight_bytes + per_row * bt + (2 << 20)
    vmem_limit = int(min(60 * 2**20, max(24 * 2**20, 3 * total_est // 2)))
    return Bp, bt, vmem_limit


# ------------------------------------------------------------------------ host wrappers


def prepare_attention_params(attn_w, attn_b, v_w):
    """Once-per-parameter-load layout prep (hoisted out of the per-decoder-step path).

    attn_w : (Hd, He+Hd)  torch nn.Linear weight [out, in]
    attn_b : (Hd,)
    v_w    : (1, Hd)      torch nn.Linear weight (no bias)

    torch.cat order is (hidden, encoder_outputs) -> the first Hd input columns of
    attn_w belong to `hidden`.
    """
    Hd = attn_w.shape[0]
    wh = jnp.asarray(attn_w[:, :Hd].T, dtype=jnp.bfloat16)     # (Hd, Hd)  in x out
    we = jnp.asarray(attn_w[:, Hd:].T, dtype=jnp.bfloat16)     # (He, Hd)
    b2 = jnp.asarray(attn_b, dtype=jnp.float32).reshape(1, Hd)
    v_row = jnp.asarray(v_w, dtype=jnp.float32).reshape(1, Hd)
    return {"wh": wh, "we": we, "b": b2, "v": v_row}


def _call_kernel(hid_bf, enc2d_bf, wh, we, b2, v_row, *, Bp, S, He, Hd, bt, vmem_limit):
    grid = (Bp // bt,)

    def build(weight_pipeline_mode):
        wkw = {} if weight_pipeline_mode is None else {"pipeline_mode": weight_pipeline_mode}
        in_specs = [
            pl.BlockSpec((bt, Hd), lambda i: (i, 0)),            # hidden tile
            pl.BlockSpec((bt * S, He), lambda i: (i, 0)),        # encoder tile (2D, lane-dense)
            pl.BlockSpec((Hd, Hd), lambda i: (0, 0), **wkw),     # W_h (constant)
            pl.BlockSpec((He, Hd), lambda i: (0, 0), **wkw),     # W_e (constant)
            pl.BlockSpec((1, Hd), lambda i: (0, 0), **wkw),      # bias (constant)
            pl.BlockSpec((1, Hd), lambda i: (0, 0), **wkw),      # v row (constant)
        ]
        return pl.pallas_call(
            _attention_kernel,
            out_shape=jax.ShapeDtypeStruct((Bp, S), jnp.float32),
            grid_spec=pltpu.PrefetchScalarGridSpec(
                num_scalar_prefetch=0,
                grid=grid,
                in_specs=in_specs,
                out_specs=pl.BlockSpec((bt, S), lambda i: (i, 0)),   # lane-dense output
            ),
            compiler_params=pltpu.CompilerParams(
                dimension_semantics=("parallel",),
                vmem_limit_bytes=vmem_limit,
            ),
        )

    try:
        # Constant-index_map operands only need a single VMEM buffer (saves VMEM,
        # material on v7x's 64 MiB, frees room for a larger batch tile).
        return build(pl.Buffered(1))(hid_bf, enc2d_bf, wh, we, b2, v_row)
    except Exception:
        # Fallback for jax versions where pipeline_mode on pallas_call BlockSpecs is
        # unsupported: default double-buffering. Semantics are identical.
        return build(None)(hid_bf, enc2d_bf, wh, we, b2, v_row)


def attention_forward(hidden, encoder_outputs, params):
    """
    hidden          : (B, Hd)      float32
    encoder_outputs : (B, S, He)   float32
    params          : output of prepare_attention_params
    returns         : (B, S)       float32 softmax attention weights
    """
    B, Hd = hidden.shape
    _, S, He = encoder_outputs.shape

    Bp, bt, vmem_limit = _tile_plan(B, S, He, Hd)

    if Bp != B:
        # Pad the batch to a sublane multiple; padded rows are sliced off below.
        hidden = jnp.pad(hidden, ((0, Bp - B), (0, 0)))
        encoder_outputs = jnp.pad(encoder_outputs, ((0, Bp - B), (0, 0), (0, 0)))

    # bf16 MXU input streams (halves HBM bytes for the dominant encoder DMA).
    hid_bf = hidden.astype(jnp.bfloat16)
    enc2d_bf = encoder_outputs.reshape(Bp * S, He).astype(jnp.bfloat16)

    out = _call_kernel(
        hid_bf, enc2d_bf, params["wh"], params["we"], params["b"], params["v"],
        Bp=Bp, S=S, He=He, Hd=Hd, bt=bt, vmem_limit=vmem_limit,
    )
    return out[:B] if Bp != B else out


# ----------------------------------------------------------------------------- reference


def _reference(hidden, encoder_outputs, attn_w, attn_b, v_w):
    """Plain-JAX f32 reference mirroring the PyTorch forward, for verification."""
    B, Hd = hidden.shape
    S = encoder_outputs.shape[1]
    h_rep = jnp.broadcast_to(hidden[:, None, :], (B, S, Hd))
    cat = jnp.concatenate([h_rep, encoder_outputs], axis=2)          # (B, S, Hd+He)
    energy = jnp.tanh(jnp.einsum("bsi,oi->bso", cat, attn_w) + attn_b)
    attention = jnp.einsum("bso,ko->bsk", energy, v_w)[..., 0]       # (B, S)
    return jax.nn.softmax(attention, axis=1)


if __name__ == "__main__":
    B, S = 2, 8
    enc_hidden_dim, dec_hidden_dim = 32, 32
    Hd, He = dec_hidden_dim, enc_hidden_dim

    key = jax.random.PRNGKey(0)
    k1, k2, k3, k4, k5 = jax.random.split(key, 5)

    hidden = jax.random.normal(k1, (B, Hd), dtype=jnp.float32)
    encoder_outputs = jax.random.normal(k2, (B, S, He), dtype=jnp.float32)

    # Deterministic parameter init matching nn.Linear shapes ([out, in]).
    lim_attn = 1.0 / np.sqrt(He + Hd)
    attn_w = jax.random.uniform(k3, (Hd, He + Hd), minval=-lim_attn, maxval=lim_attn,
                                dtype=jnp.float32)
    attn_b = jax.random.uniform(k4, (Hd,), minval=-lim_attn, maxval=lim_attn,
                                dtype=jnp.float32)
    lim_v = 1.0 / np.sqrt(Hd)
    v_w = jax.random.uniform(k5, (1, Hd), minval=-lim_v, maxval=lim_v,
                             dtype=jnp.float32)

    params = prepare_attention_params(attn_w, attn_b, v_w)   # hoisted, once per param load
    out = attention_forward(hidden, encoder_outputs, params)
    out = jax.block_until_ready(out)

    ref = _reference(hidden, encoder_outputs, attn_w, attn_b, v_w)
    # Tolerance covers the bf16 MXU-input rounding (activations / weights cast to bf16);
    # the softmax itself uses an exact f32 divide, so rows sum to 1.
    np.testing.assert_allclose(np.asarray(out), np.asarray(ref), rtol=5e-3, atol=5e-3)
    assert out.shape == (B, S)
    np.testing.assert_allclose(np.asarray(jnp.sum(out, axis=1)), np.ones(B),
                               rtol=1e-5, atol=1e-5)

    print("KERNEL_OK")
</pallas_src>

<mosaic_0001>
module attributes {stable_mosaic.version = 11 : i64} {
  func.func @_attention_kernel(%arg0: i32, %arg1: memref<8x32xbf16, #tpu.memory_space<vmem>>, %arg2: memref<64x32xbf16, #tpu.memory_space<vmem>>, %arg3: memref<32x32xbf16, #tpu.memory_space<vmem>>, %arg4: memref<32x32xbf16, #tpu.memory_space<vmem>>, %arg5: memref<1x32xf32, #tpu.memory_space<vmem>>, %arg6: memref<1x32xf32, #tpu.memory_space<vmem>>, %arg7: memref<8x8xf32, #tpu.memory_space<vmem>>) attributes {dimension_semantics = [#tpu.dimension_semantics<parallel>], iteration_bounds = array<i64: 1>, scalar_prefetch = 0 : i64, scratch_operands = 0 : i64, tpu.core_type = #tpu.core_type<tc>, window_params = [{transform_indices = @transform_0, window_bounds = array<i64: 8, 32>}, {transform_indices = @transform_1, window_bounds = array<i64: 64, 32>}, {pipeline_mode = #tpu.pipeline_mode<synchronous>, transform_indices = @transform_2, window_bounds = array<i64: 32, 32>}, {pipeline_mode = #tpu.pipeline_mode<synchronous>, transform_indices = @transform_3, window_bounds = array<i64: 32, 32>}, {pipeline_mode = #tpu.pipeline_mode<synchronous>, transform_indices = @transform_4, window_bounds = array<i64: 1, 32>}, {pipeline_mode = #tpu.pipeline_mode<synchronous>, transform_indices = @transform_5, window_bounds = array<i64: 1, 32>}, {transform_indices = @transform_6, window_bounds = array<i64: 8, 8>}]} {
    %c0 = arith.constant 0 : index
    %c0_0 = arith.constant 0 : index
    %0 = vector.load %arg1[%c0, %c0_0] : memref<8x32xbf16, #tpu.memory_space<vmem>>, vector<8x32xbf16>
    %c0_1 = arith.constant 0 : index
    %c0_2 = arith.constant 0 : index
    %1 = vector.load %arg3[%c0_1, %c0_2] : memref<32x32xbf16, #tpu.memory_space<vmem>>, vector<32x32xbf16>
    %cst = arith.constant dense<0.000000e+00> : vector<8x32xf32>
    %2 = tpu.matmul %0, %1, %cst {dimension_numbers = #tpu.dot_dimension_numbers<[1], [0], [0], [1], [0, 0, 1, 1], [], []>} : vector<8x32xbf16>, vector<32x32xbf16>, vector<8x32xf32> -> vector<8x32xf32>
    %c0_3 = arith.constant 0 : index
    %c0_4 = arith.constant 0 : index
    %3 = vector.load %arg5[%c0_3, %c0_4] : memref<1x32xf32, #tpu.memory_space<vmem>>, vector<1x32xf32>
    %4 = vector.broadcast %3 : vector<1x32xf32> to vector<8x32xf32>
    %5 = arith.addf %2, %4 : vector<8x32xf32>
    %c0_5 = arith.constant 0 : index
    %c0_6 = arith.constant 0 : index
    %6 = vector.load %arg2[%c0_5, %c0_6] : memref<64x32xbf16, #tpu.memory_space<vmem>>, vector<64x32xbf16>
    %c0_7 = arith.constant 0 : index
    %c0_8 = arith.constant 0 : index
    %7 = vector.load %arg4[%c0_7, %c0_8] : memref<32x32xbf16, #tpu.memory_space<vmem>>, vector<32x32xbf16>
    %cst_9 = arith.constant dense<0.000000e+00> : vector<64x32xf32>
    %8 = tpu.matmul %6, %7, %cst_9 {dimension_numbers = #tpu.dot_dimension_numbers<[1], [0], [0], [1], [0, 0, 1, 1], [], []>} : vector<64x32xbf16>, vector<32x32xbf16>, vector<64x32xf32> -> vector<64x32xf32>
    %9 = vector.shape_cast %8 : vector<64x32xf32> to vector<8x8x32xf32>
    %10 = vector.shape_cast %5 : vector<8x32xf32> to vector<8x1x32xf32>
    %11 = vector.broadcast %10 : vector<8x1x32xf32> to vector<8x8x32xf32>
    %12 = arith.addf %9, %11 : vector<8x8x32xf32>
    %13 = math.tanh %12 : vector<8x8x32xf32>
    %c0_10 = arith.constant 0 : index
    %c0_11 = arith.constant 0 : index
    %14 = vector.load %arg6[%c0_10, %c0_11] : memref<1x32xf32, #tpu.memory_space<vmem>>, vector<1x32xf32>
    %15 = vector.shape_cast %14 : vector<1x32xf32> to vector<1x1x32xf32>
    %16 = vector.broadcast %15 : vector<1x1x32xf32> to vector<8x8x32xf32>
    %17 = arith.mulf %13, %16 : vector<8x8x32xf32>
    %cst_12 = arith.constant dense<0.000000e+00> : vector<8x8xf32>
    %18 = vector.multi_reduction <add>, %17, %cst_12 [2] : vector<8x8x32xf32> to vector<8x8xf32>
    %cst_13 = arith.constant dense<0xFF800000> : vector<8xf32>
    %19 = vector.multi_reduction <maximumf>, %18, %cst_13 [1] : vector<8x8xf32> to vector<8xf32>
    %20 = vector.shape_cast %19 : vector<8xf32> to vector<8x1xf32>
    %21 = vector.broadcast %20 : vector<8x1xf32> to vector<8x8xf32>
    %22 = arith.subf %18, %21 : vector<8x8xf32>
    %23 = math.exp %22 : vector<8x8xf32>
    %cst_14 = arith.constant dense<0.000000e+00> : vector<8xf32>
    %24 = vector.multi_reduction <add>, %23, %cst_14 [1] : vector<8x8xf32> to vector<8xf32>
    %25 = vector.shape_cast %24 : vector<8xf32> to vector<8x1xf32>
    %26 = vector.broadcast %25 : vector<8x1xf32> to vector<8x8xf32>
    %27 = arith.divf %23, %26 : vector<8x8xf32>
    %c0_15 = arith.constant 0 : index
    %c0_16 = arith.constant 0 : index
    %28 = vector.load %arg7[%c0_15, %c0_16] : memref<8x8xf32, #tpu.memory_space<vmem>>, vector<8x8xf32>
    tpu.vector_store %arg7[%c0_15, %c0_16], %27 {strides = array<i32>} : memref<8x8xf32, #tpu.memory_space<vmem>>, vector<8x8xf32>,
    return
  }
  func.func @transform_0(%arg0: i32) -> (i32, i32) {
    %c0_i32 = arith.constant 0 : i32
    %c0_i32_0 = arith.constant 0 : i32
    return %arg0, %c0_i32 : i32, i32
  }
  func.func @transform_1(%arg0: i32) -> (i32, i32) {
    %c0_i32 = arith.constant 0 : i32
    %c0_i32_0 = arith.constant 0 : i32
    return %arg0, %c0_i32 : i32, i32
  }
  func.func @transform_2(%arg0: i32) -> (i32, i32) {
    %c0_i32 = arith.constant 0 : i32
    %c0_i32_0 = arith.constant 0 : i32
    %c0_i32_1 = arith.constant 0 : i32
    return %c0_i32, %c0_i32_0 : i32, i32
  }
  func.func @transform_3(%arg0: i32) -> (i32, i32) {
    %c0_i32 = arith.constant 0 : i32
    %c0_i32_0 = arith.constant 0 : i32
    %c0_i32_1 = arith.constant 0 : i32
    return %c0_i32, %c0_i32_0 : i32, i32
  }
  func.func @transform_4(%arg0: i32) -> (i32, i32) {
    %c0_i32 = arith.constant 0 : i32
    %c0_i32_0 = arith.constant 0 : i32
    %c0_i32_1 = arith.constant 0 : i32
    return %c0_i32, %c0_i32_0 : i32, i32
  }
  func.func @transform_5(%arg0: i32) -> (i32, i32) {
    %c0_i32 = arith.constant 0 : i32
    %c0_i32_0 = arith.constant 0 : i32
    %c0_i32_1 = arith.constant 0 : i32
    return %c0_i32, %c0_i32_0 : i32, i32
  }
  func.func @transform_6(%arg0: i32) -> (i32, i32) {
    %c0_i32 = arith.constant 0 : i32
    %c0_i32_0 = arith.constant 0 : i32
    return %arg0, %c0_i32 : i32, i32
  }
}

module attributes {stable_mosaic.version = 11 : i64} {
  func.func @_attention_kernel(%arg0: i32, %arg1: memref<8x32xbf16, #tpu.memory_space<vmem>>, %arg2: memref<64x32xbf16, #tpu.memory_space<vmem>>, %arg3: memref<32x32xbf16, #tpu.memory_space<vmem>>, %arg4: memref<32x32xbf16, #tpu.memory_space<vmem>>, %arg5: memref<1x32xf32, #tpu.memory_space<vmem>>, %arg6: memref<1x32xf32, #tpu.memory_space<vmem>>, %arg7: memref<8x8xf32, #tpu.memory_space<vmem>>) attributes {dimension_semantics = [#tpu.dimension_semantics<parallel>], iteration_bounds = array<i64: 1>, scalar_prefetch = 0 : i64, scratch_operands = 0 : i64, tpu.core_type = #tpu.core_type<tc>, window_params = [{transform_indices = @transform_0, window_bounds = array<i64: 8, 32>}, {transform_indices = @transform_1, window_bounds = array<i64: 64, 32>}, {pipeline_mode = #tpu.pipeline_mode<synchronous>, transform_indices = @transform_2, window_bounds = array<i64: 32, 32>}, {pipeline_mode = #tpu.pipeline_mode<synchronous>, transform_indices = @transform_3, window_bounds = array<i64: 32, 32>}, {pipeline_mode = #tpu.pipeline_mode<synchronous>, transform_indices = @transform_4, window_bounds = array<i64: 1, 32>}, {pipeline_mode = #tpu.pipeline_mode<synchronous>, transform_indices = @transform_5, window_bounds = array<i64: 1, 32>}, {transform_indices = @transform_6, window_bounds = array<i64: 8, 8>}]} {
    %c0 = arith.constant 0 : index
    %c0_0 = arith.constant 0 : index
    %0 = vector.load %arg1[%c0, %c0_0] : memref<8x32xbf16, #tpu.memory_space<vmem>>, vector<8x32xbf16>
    %c0_1 = arith.constant 0 : index
    %c0_2 = arith.constant 0 : index
    %1 = vector.load %arg3[%c0_1, %c0_2] : memref<32x32xbf16, #tpu.memory_space<vmem>>, vector<32x32xbf16>
    %cst = arith.constant dense<0.000000e+00> : vector<8x32xf32>
    %2 = tpu.matmul %0, %1, %cst {dimension_numbers = #tpu.dot_dimension_numbers<[1], [0], [0], [1], [0, 0, 1, 1], [], []>} : vector<8x32xbf16>, vector<32x32xbf16>, vector<8x32xf32> -> vector<8x32xf32>
    %c0_3 = arith.constant 0 : index
    %c0_4 = arith.constant 0 : index
    %3 = vector.load %arg5[%c0_3, %c0_4] : memref<1x32xf32, #tpu.memory_space<vmem>>, vector<1x32xf32>
    %4 = vector.broadcast %3 : vector<1x32xf32> to vector<8x32xf32>
    %5 = arith.addf %2, %4 : vector<8x32xf32>
    %c0_5 = arith.constant 0 : index
    %c0_6 = arith.constant 0 : index
    %6 = vector.load %arg2[%c0_5, %c0_6] : memref<64x32xbf16, #tpu.memory_space<vmem>>, vector<64x32xbf16>
    %c0_7 = arith.constant 0 : index
    %c0_8 = arith.constant 0 : index
    %7 = vector.load %arg4[%c0_7, %c0_8] : memref<32x32xbf16, #tpu.memory_space<vmem>>, vector<32x32xbf16>
    %cst_9 = arith.constant dense<0.000000e+00> : vector<64x32xf32>
    %8 = tpu.matmul %6, %7, %cst_9 {dimension_numbers = #tpu.dot_dimension_numbers<[1], [0], [0], [1], [0, 0, 1, 1], [], []>} : vector<64x32xbf16>, vector<32x32xbf16>, vector<64x32xf32> -> vector<64x32xf32>
    %9 = vector.shape_cast %8 : vector<64x32xf32> to vector<8x8x32xf32>
    %10 = vector.shape_cast %5 : vector<8x32xf32> to vector<8x1x32xf32>
    %11 = vector.broadcast %10 : vector<8x1x32xf32> to vector<8x8x32xf32>
    %12 = arith.addf %9, %11 : vector<8x8x32xf32>
    %13 = math.tanh %12 : vector<8x8x32xf32>
    %c0_10 = arith.constant 0 : index
    %c0_11 = arith.constant 0 : index
    %14 = vector.load %arg6[%c0_10, %c0_11] : memref<1x32xf32, #tpu.memory_space<vmem>>, vector<1x32xf32>
    %15 = vector.shape_cast %14 : vector<1x32xf32> to vector<1x1x32xf32>
    %16 = vector.broadcast %15 : vector<1x1x32xf32> to vector<8x8x32xf32>
    %17 = arith.mulf %13, %16 : vector<8x8x32xf32>
    %cst_12 = arith.constant dense<0.000000e+00> : vector<8x8xf32>
    %18 = vector.multi_reduction <add>, %17, %cst_12 [2] : vector<8x8x32xf32> to vector<8x8xf32>
    %cst_13 = arith.constant dense<0xFF800000> : vector<8xf32>
    %19 = vector.multi_reduction <maximumf>, %18, %cst_13 [1] : vector<8x8xf32> to vector<8xf32>
    %20 = vector.shape_cast %19 : vector<8xf32> to vector<8x1xf32>
    %21 = vector.broadcast %20 : vector<8x1xf32> to vector<8x8xf32>
    %22 = arith.subf %18, %21 : vector<8x8xf32>
    %23 = math.exp %22 : vector<8x8xf32>
    %cst_14 = arith.constant dense<0.000000e+00> : vector<8xf32>
    %24 = vector.multi_reduction <add>, %23, %cst_14 [1] : vector<8x8xf32> to vector<8xf32>
    %25 = vector.shape_cast %24 : vector<8xf32> to vector<8x1xf32>
    %26 = vector.broadcast %25 : vector<8x1xf32> to vector<8x8xf32>
    %27 = arith.divf %23, %26 : vector<8x8xf32>
    %c0_15 = arith.constant 0 : index
    %c0_16 = arith.constant 0 : index
    %28 = vector.load %arg7[%c0_15, %c0_16] : memref<8x8xf32, #tpu.memory_space<vmem>>, vector<8x8xf32>
    tpu.vector_store %arg7[%c0_15, %c0_16], %27 {strides = array<i32>} : memref<8x8xf32, #tpu.memory_space<vmem>>, vector<8x8xf32>,
    return
  }
  func.func @transform_0(%arg0: i32) -> (i32, i32) {
    %c0_i32 = arith.constant 0 : i32
    %c0_i32_0 = arith.constant 0 : i32
    return %arg0, %c0_i32 : i32, i32
  }
  func.func @transform_1(%arg0: i32) -> (i32, i32) {
    %c0_i32 = arith.constant 0 : i32
    %c0_i32_0 = arith.constant 0 : i32
    return %arg0, %c0_i32 : i32, i32
  }
  func.func @transform_2(%arg0: i32) -> (i32, i32) {
    %c0_i32 = arith.constant 0 : i32
    %c0_i32_0 = arith.constant 0 : i32
    %c0_i32_1 = arith.constant 0 : i32
    return %c0_i32, %c0_i32_0 : i32, i32
  }
  func.func @transform_3(%arg0: i32) -> (i32, i32) {
    %c0_i32 = arith.constant 0 : i32
    %c0_i32_0 = arith.constant 0 : i32
    %c0_i32_1 = arith.constant 0 : i32
    return %c0_i32, %c0_i32_0 : i32, i32
  }
  func.func @transform_4(%arg0: i32) -> (i32, i32) {
    %c0_i32 = arith.constant 0 : i32
    %c0_i32_0 = arith.constant 0 : i32
    %c0_i32_1 = arith.constant 0 : i32
    return %c0_i32, %c0_i32_0 : i32, i32
  }
  func.func @transform_5(%arg0: i32) -> (i32, i32) {
    %c0_i32 = arith.constant 0 : i32
    %c0_i32_0 = arith.constant 0 : i32
    %c0_i32_1 = arith.constant 0 : i32
    return %c0_i32, %c0_i32_0 : i32, i32
  }
  func.func @transform_6(%arg0: i32) -> (i32, i32) {
    %c0_i32 = arith.constant 0 : i32
    %c0_i32_0 = arith.constant 0 : i32
    return %arg0, %c0_i32 : i32, i32
  }
}

</mosaic_0001>

<llo_original>
// kernel: tpu_custom_call.1
$region0: #{tpu_custom_call.1}
  #allocation0 [shape = 'u32[]', space=smem, size = 0x4, offset = 0x4, fixed_abs, tag = 'smem constant byte address 0x4 - core index']
  #allocation1 [shape = 'u32[144,128]{1,0:T(1,128)}', space=vmem, size = 0x12000, scoped, tag = 'internal scratch']
  %s0 = inlined_call_operand.vmem [shape: bf16[8,32], index: 0, kind: input, shape index: {}]
  %s1 = inlined_call_operand.vmem [shape: bf16[64,32], index: 1, kind: input, shape index: {}]
  %s2 = inlined_call_operand.vmem [shape: bf16[32,32], index: 2, kind: input, shape index: {}]
  %s3 = inlined_call_operand.vmem [shape: bf16[32,32], index: 3, kind: input, shape index: {}]
  %s4 = inlined_call_operand.vmem [shape: f32[1,32], index: 4, kind: input, shape index: {}]
  %s5 = inlined_call_operand.vmem [shape: f32[1,32], index: 5, kind: input, shape index: {}]
  %s6 = inlined_call_operand.hbm [shape: f32[8,8], index: 6, kind: output, shape index: {}]
  %s7 = sld [smem:[#allocation0]]
  $region34: #{tpu_custom_call.1} parent=0
    _
  %s9 = ssub.s32 1, %s7
  %s10 = scalar_select 0, %s9, %s7
  $region1: #{tpu_custom_call.1} parent=0
    #allocation2 [shape = 'u8[4096]{0}', space=vmem, size = 0x1000, scoped, tag = 'output window, operand 0, single buffered']
    #allocation3 [shape = 's32[1]{0}', space=sflag, size = 0x4, scoped, tag = 'scoped memory for tpu_custom_call.1']
    %11 = vsyncpa [#allocation3], 0
    // Predicated region
    $region2: #{tpu_custom_call.1} parent=1 // pred_check
      _
    $region3: #{tpu_custom_call.1} parent=1 // pred_check_branch
      %13 = sbr.rel (0) target = $region5
    $region4: #{tpu_custom_call.1} parent=1 // pred_region
      _
    $region5: #{tpu_custom_call.1} parent=1 // pred_fallthru
      _
    // Predicated region
    $region6: #{tpu_custom_call.1} parent=1 // pred_check
      _
    $region7: #{tpu_custom_call.1} parent=1 // pred_check_branch
      %15 = sbr.rel (0) target = $region9
    $region8: #{tpu_custom_call.1} parent=1 // pred_region
      _
    $region9: #{tpu_custom_call.1} parent=1 // pred_fallthru
      _
    // Predicated region
    $region10: #{tpu_custom_call.1} parent=1 // pred_check
      _
    $region11: #{tpu_custom_call.1} parent=1 // pred_check_branch
      %17 = sbr.rel (0) target = $region13
    $region12: #{tpu_custom_call.1} parent=1 // pred_region
      _
    $region13: #{tpu_custom_call.1} parent=1 // pred_fallthru
      _
    // Predicated region
    $region14: #{tpu_custom_call.1} parent=1 // pred_check
      _
    $region15: #{tpu_custom_call.1} parent=1 // pred_check_branch
      %19 = sbr.rel (0) target = $region17
    $region16: #{tpu_custom_call.1} parent=1 // pred_region
      _
    $region17: #{tpu_custom_call.1} parent=1 // pred_fallthru
      _
    // Predicated region
    $region18: #{tpu_custom_call.1} parent=1 // pred_check
      _
    $region19: #{tpu_custom_call.1} parent=1 // pred_check_branch
      %21 = sbr.rel (0) target = $region21
    $region20: #{tpu_custom_call.1} parent=1 // pred_region
      _
    $region21: #{tpu_custom_call.1} parent=1 // pred_fallthru
      _
    // Predicated region
    $region22: #{tpu_custom_call.1} parent=1 // pred_check
      _
    $region23: #{tpu_custom_call.1} parent=1 // pred_check_branch
      %23 = sbr.rel (0) target = $region25
    $region24: #{tpu_custom_call.1} parent=1 // pred_region
      _
    $region25: #{tpu_custom_call.1} parent=1 // pred_fallthru
      _
    %v25 = vld [vmem:[%s0] sm:$0xf]
    %v26 = vld [vmem:[%s2] sm:$0xf]
    %v27 = vld [vmem:[%s2 + $0x4] sm:$0xf]
    %v28 = vld [vmem:[%s2 + $0x8] sm:$0xf]
    %v29 = vld [vmem:[%s2 + $0xc] sm:$0xf]
    %v30 = vld [vmem:[%s4] sm:$0x1]
    %v32 = vlaneseq
    %v33 = vshrl.u32 %v32, 7
    %v34 = vsub.s32 0, %v33
    %v35 = vrot.slane %v30, %v34
    %v41 = vunpack.c.l.b16 %v26
    %v42 = vunpack.c.l.b16 %v27
    %v43 = vunpack.c.l.b16 %v28
    %v44 = vunpack.c.l.b16 %v29
    %v45 = vpack.c.b16 %v42, %v41
    %v46 = vpack.c.b16 %v44, %v43
    %vm49 = vcmask 261120
    %v51 = vsel %vm49, %v25, 0
    %53 = vmatprep.subr.bf16.mxu0 0
    %54 = vmatpush1.bf16.msra.mxu0 %v45
    %55 = vmatprep.subr.bf16.mxu0 0
    %56 = vmatpush1.bf16.msra.mxu0 %v46
    %57 = vmatprep.subr.bf16.mxu0 0
    %58 = vmatpush1.bf16.msra.mxu0 0
    %59 = vmatprep.subr.bf16.mxu0 0
    %60 = vmatpush1.bf16.msra.mxu0 0
    %61 = vmatprep.subr.bf16.mxu0 0
    %62 = vmatpush1.bf16.msra.mxu0 0
    %63 = vmatprep.subr.bf16.mxu0 0
    %64 = vmatpush1.bf16.msra.mxu0 0
    %65 = vmatprep.subr.bf16.mxu0 0
    %66 = vmatpush1.bf16.msra.mxu0 0
    %67 = vmatprep.subr.bf16.mxu0 0
    %68 = vmatpush1.bf16.msra.mxu0 0
    %69 = vmatprep.subr.bf16.mxu0 0
    %70 = vmatpush1.bf16.msra.mxu0 0
    %71 = vmatprep.subr.bf16.mxu0 0
    %72 = vmatpush1.bf16.msra.mxu0 0
    %73 = vmatprep.subr.bf16.mxu0 0
    %74 = vmatpush1.bf16.msra.mxu0 0
    %75 = vmatprep.subr.bf16.mxu0 0
    %76 = vmatpush1.bf16.msra.mxu0 0
    %77 = vmatprep.subr.bf16.mxu0 0
    %78 = vmatpush1.bf16.msra.mxu0 0
    %79 = vmatprep.subr.bf16.mxu0 0
    %80 = vmatpush1.bf16.msra.mxu0 0
    %81 = vmatprep.subr.bf16.mxu0 0
    %82 = vmatpush1.bf16.msra.mxu0 0
    %83 = vmatprep.subr.bf16.mxu0 0
    %84 = vmatpush1.bf16.msra.mxu0 0
    %85 = vmatprep.mubr.bf16.mxu0 0
    %86 = vmatmul.mubr.bf16.gmra.mrb[0].mxu0 %v51
    %v87 = vpop.f32.mrb[0].mxu0
    %v88 = vadd.f32 %v35, %v87
    %v89 = vpop.f32.mrb[0].mxu0
    %v90 = vpop.f32.mrb[0].mxu0
    %v91 = vpop.f32.mrb[0].mxu0
    %92 = vdwg.mxu0
    %v93 = vld [vmem:[%s1] sm:$0xf]
    %v94 = vld [vmem:[%s1 + $0x4] sm:$0xf]
    %v95 = vld [vmem:[%s1 + $0x8] sm:$0xf]
    %v96 = vld [vmem:[%s1 + $0xc] sm:$0xf]
    %v97 = vld [vmem:[%s1 + $0x10] sm:$0xf]
    %v98 = vld [vmem:[%s1 + $0x14] sm:$0xf]
    %v99 = vld [vmem:[%s1 + $0x18] sm:$0xf]
    %v100 = vld [vmem:[%s1 + $0x1c] sm:$0xf]
    %v101 = vld [vmem:[%s3] sm:$0xf]
    %v102 = vld [vmem:[%s3 + $0x4] sm:$0xf]
    %v103 = vld [vmem:[%s3 + $0x8] sm:$0xf]
    %v104 = vld [vmem:[%s3 + $0xc] sm:$0xf]
    %v113 = vunpack.c.l.b16 %v93
    %v114 = vunpack.c.l.b16 %v94
    %v115 = vunpack.c.l.b16 %v95
    %v116 = vunpack.c.l.b16 %v96
    %v117 = vunpack.c.l.b16 %v97
    %v118 = vunpack.c.l.b16 %v98
    %v119 = vunpack.c.l.b16 %v99
    %v120 = vunpack.c.l.b16 %v100
    %v121 = vpack.c.b16 %v114, %v113
    %v122 = vpack.c.b16 %v116, %v115
    %v123 = vpack.c.b16 %v118, %v117
    %v124 = vpack.c.b16 %v120, %v119
    %v129 = vunpack.c.l.b16 %v101
    %v130 = vunpack.c.l.b16 %v102
    %v131 = vunpack.c.l.b16 %v103
    %v132 = vunpack.c.l.b16 %v104
    %v133 = vpack.c.b16 %v130, %v129
    %v134 = vpack.c.b16 %v132, %v131
    %v138 = vsel %vm49, %v121, 0
    %v141 = vsel %vm49, %v122, 0
    %v144 = vsel %vm49, %v123, 0
    %v147 = vsel %vm49, %v124, 0
    %149 = vmatprep.subr.bf16.mxu0 0
    %150 = vmatpush1.bf16.msra.mxu0 %v133
    %151 = vmatprep.subr.bf16.mxu0 0
    %152 = vmatpush1.bf16.msra.mxu0 %v134
    %153 = vmatprep.subr.bf16.mxu0 0
    %154 = vmatpush1.bf16.msra.mxu0 0
    %155 = vmatprep.subr.bf16.mxu0 0
    %156 = vmatpush1.bf16.msra.mxu0 0
    %157 = vmatprep.subr.bf16.mxu0 0
    %158 = vmatpush1.bf16.msra.mxu0 0
    %159 = vmatprep.subr.bf16.mxu0 0
    %160 = vmatpush1.bf16.msra.mxu0 0
    %161 = vmatprep.subr.bf16.mxu0 0
    %162 = vmatpush1.bf16.msra.mxu0 0
    %163 = vmatprep.subr.bf16.mxu0 0
    %164 = vmatpush1.bf16.msra.mxu0 0
    %165 = vmatprep.subr.bf16.mxu0 0
    %166 = vmatpush1.bf16.msra.mxu0 0
    %167 = vmatprep.subr.bf16.mxu0 0
    %168 = vmatpush1.bf16.msra.mxu0 0
    %169 = vmatprep.subr.bf16.mxu0 0
    %170 = vmatpush1.bf16.msra.mxu0 0
    %171 = vmatprep.subr.bf16.mxu0 0
    %172 = vmatpush1.bf16.msra.mxu0 0
    %173 = vmatprep.subr.bf16.mxu0 0
    %174 = vmatpush1.bf16.msra.mxu0 0
    %175 = vmatprep.subr.bf16.mxu0 0
    %176 = vmatpush1.bf16.msra.mxu0 0
    %177 = vmatprep.subr.bf16.mxu0 0
    %178 = vmatpush1.bf16.msra.mxu0 0
    %179 = vmatprep.subr.bf16.mxu0 0
    %180 = vmatpush1.bf16.msra.mxu0 0
    %181 = vmatprep.mubr.bf16.mxu0 0
    %182 = vmatmul.mubr.bf16.gmra.mrb[0].mxu0 %v138
    %v183 = vpop.f32.mrb[0].mxu0
    %v184 = vadd.f32 0.0, %v183
    %v185 = vpop.f32.mrb[0].mxu0
    %v186 = vpop.f32.mrb[0].mxu0
    %v187 = vadd.f32 0.0, %v186
    %v188 = vpop.f32.mrb[0].mxu0
    %189 = vmatprep.mubr.bf16.mxu0 0
    %190 = vmatmul.mubr.bf16.gmra.mrb[0].mxu0 %v141
    %v191 = vpop.f32.mrb[0].mxu0
    %v192 = vadd.f32 0.0, %v191
    %v193 = vpop.f32.mrb[0].mxu0
    %v194 = vpop.f32.mrb[0].mxu0
    %v195 = vadd.f32 0.0, %v194
    %v196 = vpop.f32.mrb[0].mxu0
    %197 = vmatprep.mubr.bf16.mxu0 0
    %198 = vmatmul.mubr.bf16.gmra.mrb[0].mxu0 %v144
    %v199 = vpop.f32.mrb[0].mxu0
    %v200 = vadd.f32 0.0, %v199
    %v201 = vpop.f32.mrb[0].mxu0
    %v202 = vpop.f32.mrb[0].mxu0
    %v203 = vadd.f32 0.0, %v202
    %v204 = vpop.f32.mrb[0].mxu0
    %205 = vmatprep.mubr.bf16.mxu0 0
    %206 = vmatmul.mubr.bf16.gmra.mrb[0].mxu0 %v147
    %v207 = vpop.f32.mrb[0].mxu0
    %v208 = vadd.f32 0.0, %v207
    %v209 = vpop.f32.mrb[0].mxu0
    %v210 = vpop.f32.mrb[0].mxu0
    %v211 = vadd.f32 0.0, %v210
    %v212 = vpop.f32.mrb[0].mxu0
    %213 = vdwg.mxu0
    %v215 = vcombine.high %v88, %v88
    %v217 = vunpack.c.l.s4 1966171168
    %v218 = vunpack.c.0.s8 %v217
    %v219 = vlaneseq
    %v220 = vshrl.u32 %v219, 7
    %v221 = vsub.s32 %v218, %v220
    %v222 = vrot.slane %v88, %v221
    %v224 = vunpack.c.l.s4 1966171168
    %v225 = vunpack.c.0.s8 %v224
    %v226 = vlaneseq
    %v227 = vshrl.u32 %v226, 7
    %v228 = vsub.s32 %v225, %v227
    %v229 = vrot.slane %v215, %v228
    %v230 = vcombine.high %v222, %v222
    %v231 = vcombine.high %v229, %v229
    %v233 = vunpack.c.l.s4 1966171168
    %v234 = vunpack.c.0.s8 %v233
    %v235 = vlaneseq
    %v236 = vshrl.u32 %v235, 7
    %v237 = vsub.s32 %v234, %v236
    %v238 = vrot.slane %v222, %v237
    %v240 = vunpack.c.l.s4 1966171168
    %v241 = vunpack.c.0.s8 %v240
    %v242 = vlaneseq
    %v243 = vshrl.u32 %v242, 7
    %v244 = vsub.s32 %v241, %v243
    %v245 = vrot.slane %v229, %v244
    %v247 = vunpack.c.l.s4 1966171168
    %v248 = vunpack.c.0.s8 %v247
    %v249 = vlaneseq
    %v250 = vshrl.u32 %v249, 7
    %v251 = vsub.s32 %v248, %v250
    %v252 = vrot.slane %v230, %v251
    %v254 = vunpack.c.l.s4 1966171168
    %v255 = vunpack.c.0.s8 %v254
    %v256 = vlaneseq
    %v257 = vshrl.u32 %v256, 7
    %v258 = vsub.s32 %v255, %v257
    %v259 = vrot.slane %v231, %v258
    %v260 = vcombine.high %v238, %v238
    %v261 = vcombine.high %v245, %v245
    %v262 = vcombine.high %v252, %v252
    %v263 = vcombine.high %v259, %v259
    %v264 = vlaneseq
    %v265 = vshrl.u32 %v264, 7
    %v266 = vsub.s32 0, %v265
    %v267 = vrot.slane %v238, %v266
    %v268 = vlaneseq
    %v269 = vshrl.u32 %v268, 7
    %v270 = vsub.s32 0, %v269
    %v271 = vrot.slane %v252, %v270
    %v272 = vlaneseq
    %v273 = vshrl.u32 %v272, 7
    %v274 = vsub.s32 0, %v273
    %v275 = vrot.slane %v260, %v274
    %v276 = vlaneseq
    %v277 = vshrl.u32 %v276, 7
    %v278 = vsub.s32 0, %v277
    %v279 = vrot.slane %v262, %v278
    %v280 = vlaneseq
    %v281 = vshrl.u32 %v280, 7
    %v282 = vsub.s32 0, %v281
    %v283 = vrot.slane %v245, %v282
    %v284 = vlaneseq
    %v285 = vshrl.u32 %v284, 7
    %v286 = vsub.s32 0, %v285
    %v287 = vrot.slane %v259, %v286
    %v288 = vlaneseq
    %v289 = vshrl.u32 %v288, 7
    %v290 = vsub.s32 0, %v289
    %v291 = vrot.slane %v261, %v290
    %v292 = vlaneseq
    %v293 = vshrl.u32 %v292, 7
    %v294 = vsub.s32 0, %v293
    %v295 = vrot.slane %v263, %v294
    %v304 = vadd.f32 %v184, %v267
    %v305 = vadd.f32 %v187, %v271
    %v306 = vadd.f32 %v192, %v275
    %v307 = vadd.f32 %v195, %v279
    %v308 = vadd.f32 %v200, %v283
    %v309 = vadd.f32 %v203, %v287
    %v310 = vadd.f32 %v208, %v291
    %v311 = vadd.f32 %v211, %v295
    %v312 = vtanh.pop %v304
    %v313 = vtanh.pop %v305
    %v314 = vtanh.pop %v306
    %v315 = vtanh.pop %v307
    %v316 = vtanh.pop %v308
    %v317 = vtanh.pop %v309
    %v318 = vtanh.pop %v310
    %v319 = vtanh.pop %v311
    %v320 = vld [vmem:[%s5] sm:$0x1]
    %v322 = vlaneseq
    %v323 = vshrl.u32 %v322, 7
    %v324 = vsub.s32 0, %v323
    %v325 = vrot.slane %v320, %v324
    %v327 = vmul.f32 %v312, %v325
    %v328 = vmul.f32 %v313, %v325
    %v329 = vmul.f32 %v314, %v325
    %v330 = vmul.f32 %v315, %v325
    %v331 = vmul.f32 %v316, %v325
    %v332 = vmul.f32 %v317, %v325
    %v333 = vmul.f32 %v318, %v325
    %v334 = vmul.f32 %v319, %v325
    %v335 = vsel %vm49, %v327, 0.0
    %336 = vadd.xlane.f32.xlu0 %v335
    %v337 = vpop.xlane.xlu0 %336
    %v338 = vsel %vm49, %v328, 0.0
    %339 = vadd.xlane.f32.xlu0 %v338
    %v340 = vpop.xlane.xlu0 %339
    %v341 = vsel %vm49, %v329, 0.0
    %342 = vadd.xlane.f32.xlu0 %v341
    %v343 = vpop.xlane.xlu0 %342
    %v344 = vsel %vm49, %v330, 0.0
    %345 = vadd.xlane.f32.xlu0 %v344
    %v346 = vpop.xlane.xlu0 %345
    %v347 = vsel %vm49, %v331, 0.0
    %348 = vadd.xlane.f32.xlu0 %v347
    %v349 = vpop.xlane.xlu0 %348
    %v350 = vsel %vm49, %v332, 0.0
    %351 = vadd.xlane.f32.xlu0 %v350
    %v352 = vpop.xlane.xlu0 %351
    %v353 = vsel %vm49, %v333, 0.0
    %354 = vadd.xlane.f32.xlu0 %v353
    %v355 = vpop.xlane.xlu0 %354
    %v356 = vsel %vm49, %v334, 0.0
    %357 = vadd.xlane.f32.xlu0 %v356
    %v358 = vpop.xlane.xlu0 %357
    %v367 = vlaneseq
    %v368 = vand.u32 %v367, 127
    %v369 = vlaneseq
    %v370 = vshrl.u32 %v369, 7
    %v371 = vsub.s32 %v368, %v370
    %v372 = vrot.slane %v337, %v371
    %v373 = vlaneseq
    %v374 = vshrl.u32 %v373, 7
    %v375 = vsub.s32 %v368, %v374
    %v376 = vrot.slane %v340, %v375
    %v377 = vlaneseq
    %v378 = vshrl.u32 %v377, 7
    %v379 = vsub.s32 %v368, %v378
    %v380 = vrot.slane %v343, %v379
    %v381 = vlaneseq
    %v382 = vshrl.u32 %v381, 7
    %v383 = vsub.s32 %v368, %v382
    %v384 = vrot.slane %v346, %v383
    %v385 = vlaneseq
    %v386 = vshrl.u32 %v385, 7
    %v387 = vsub.s32 %v368, %v386
    %v388 = vrot.slane %v349, %v387
    %v389 = vlaneseq
    %v390 = vshrl.u32 %v389, 7
    %v391 = vsub.s32 %v368, %v390
    %v392 = vrot.slane %v352, %v391
    %v393 = vlaneseq
    %v394 = vshrl.u32 %v393, 7
    %v395 = vsub.s32 %v368, %v394
    %v396 = vrot.slane %v355, %v395
    %v397 = vlaneseq
    %v398 = vshrl.u32 %v397, 7
    %v399 = vsub.s32 %v368, %v398
    %v400 = vrot.slane %v358, %v399
    %vm401 = vcmask 1041409
    %v402 = vsel %vm401, %v376, %v372
    %vm403 = vcmask 1042434
    %v404 = vsel %vm403, %v380, %v402
    %vm405 = vcmask 1043459
    %v406 = vsel %vm405, %v384, %v404
    %vm407 = vcmask 1044484
    %v408 = vsel %vm407, %v388, %v406
    %vm409 = vcmask 1045509
    %v410 = vsel %vm409, %v392, %v408
    %vm411 = vcmask 1046534
    %v412 = vsel %vm411, %v396, %v410
    %vm413 = vcmask 1047559
    %v414 = vsel %vm413, %v400, %v412
    %vm416 = vcmask 64512
    %v417 = vsel %vm416, %v414, -inf
    %418 = vmax.xlane.f32.xlu0 %v417
    %v419 = vpop.xlane.xlu0 %418
    %v421 = vlaneseq
    %v422 = vshrl.u32 %v421, 7
    %v423 = vsub.s32 0, %v422
    %v424 = vrot.slane %v419, %v423
    %v425 = vlaneseq
    %v426 = vshrl.u32 %v425, 7
    %v427 = vsub.s32 1, %v426
    %v428 = vrot.slane %v419, %v427
    %v429 = vlaneseq
    %v430 = vshrl.u32 %v429, 7
    %v431 = vsub.s32 2, %v430
    %v432 = vrot.slane %v419, %v431
    %v433 = vlaneseq
    %v434 = vshrl.u32 %v433, 7
    %v435 = vsub.s32 3, %v434
    %v436 = vrot.slane %v419, %v435
    %v437 = vlaneseq
    %v438 = vshrl.u32 %v437, 7
    %v439 = vsub.s32 4, %v438
    %v440 = vrot.slane %v419, %v439
    %v441 = vlaneseq
    %v442 = vshrl.u32 %v441, 7
    %v443 = vsub.s32 5, %v442
    %v444 = vrot.slane %v419, %v443
    %v445 = vlaneseq
    %v446 = vshrl.u32 %v445, 7
    %v447 = vsub.s32 6, %v446
    %v448 = vrot.slane %v419, %v447
    %v449 = vlaneseq
    %v450 = vshrl.u32 %v449, 7
    %v451 = vsub.s32 7, %v450
    %v452 = vrot.slane %v419, %v451
    %v461 = vsub.f32 %v337, %v424
    %v462 = vsub.f32 %v340, %v428
    %v463 = vsub.f32 %v343, %v432
    %v464 = vsub.f32 %v346, %v436
    %v465 = vsub.f32 %v349, %v440
    %v466 = vsub.f32 %v352, %v444
    %v467 = vsub.f32 %v355, %v448
    %v468 = vsub.f32 %v358, %v452
    %v469 = vmul.f32 %v461, 1.442695
    %v470 = vpow.pop %v469
    %v471 = vmul.f32 %v462, 1.442695
    %v472 = vpow.pop %v471
    %v473 = vmul.f32 %v463, 1.442695
    %v474 = vpow.pop %v473
    %v475 = vmul.f32 %v464, 1.442695
    %v476 = vpow.pop %v475
    %v477 = vmul.f32 %v465, 1.442695
    %v478 = vpow.pop %v477
    %v479 = vmul.f32 %v466, 1.442695
    %v480 = vpow.pop %v479
    %v481 = vmul.f32 %v467, 1.442695
    %v482 = vpow.pop %v481
    %v483 = vmul.f32 %v468, 1.442695
    %v484 = vpow.pop %v483
    %493 = vset.pattern.permute.xlu0 0
    %494 = vperm.xlu0 %493, %v470
    %v495 = vpop.permute.xlu0 %494
    %496 = vset.pattern.permute.xlu0 0
    %497 = vperm.xlu0 %496, %v472
    %v498 = vpop.permute.xlu0 %497
    %499 = vset.pattern.permute.xlu0 0
    %500 = vperm.xlu0 %499, %v474
    %v501 = vpop.permute.xlu0 %500
    %502 = vset.pattern.permute.xlu0 0
    %503 = vperm.xlu0 %502, %v476
    %v504 = vpop.permute.xlu0 %503
    %505 = vset.pattern.permute.xlu0 0
    %506 = vperm.xlu0 %505, %v478
    %v507 = vpop.permute.xlu0 %506
    %508 = vset.pattern.permute.xlu0 0
    %509 = vperm.xlu0 %508, %v480
    %v510 = vpop.permute.xlu0 %509
    %511 = vset.pattern.permute.xlu0 0
    %512 = vperm.xlu0 %511, %v482
    %v513 = vpop.permute.xlu0 %512
    %514 = vset.pattern.permute.xlu0 0
    %515 = vperm.xlu0 %514, %v484
    %v516 = vpop.permute.xlu0 %515
    %v517 = vlaneseq
    %v518 = vshrl.u32 %v517, 7
    %v519 = vsub.s32 %v368, %v518
    %v520 = vrot.slane %v495, %v519
    %v521 = vlaneseq
    %v522 = vshrl.u32 %v521, 7
    %v523 = vsub.s32 %v368, %v522
    %v524 = vrot.slane %v498, %v523
    %v525 = vlaneseq
    %v526 = vshrl.u32 %v525, 7
    %v527 = vsub.s32 %v368, %v526
    %v528 = vrot.slane %v501, %v527
    %v529 = vlaneseq
    %v530 = vshrl.u32 %v529, 7
    %v531 = vsub.s32 %v368, %v530
    %v532 = vrot.slane %v504, %v531
    %v533 = vlaneseq
    %v534 = vshrl.u32 %v533, 7
    %v535 = vsub.s32 %v368, %v534
    %v536 = vrot.slane %v507, %v535
    %v537 = vlaneseq
    %v538 = vshrl.u32 %v537, 7
    %v539 = vsub.s32 %v368, %v538
    %v540 = vrot.slane %v510, %v539
    %v541 = vlaneseq
    %v542 = vshrl.u32 %v541, 7
    %v543 = vsub.s32 %v368, %v542
    %v544 = vrot.slane %v513, %v543
    %v545 = vlaneseq
    %v546 = vshrl.u32 %v545, 7
    %v547 = vsub.s32 %v368, %v546
    %v548 = vrot.slane %v516, %v547
    %v549 = vsel %vm401, %v524, %v520
    %v550 = vsel %vm403, %v528, %v549
    %v551 = vsel %vm405, %v532, %v550
    %v552 = vsel %vm407, %v536, %v551
    %v553 = vsel %vm409, %v540, %v552
    %v554 = vsel %vm411, %v544, %v553
    %v555 = vsel %vm413, %v548, %v554
    %v557 = vsel %vm416, %v555, 0.0
    %558 = vadd.xlane.f32.xlu0 %v557
    %v559 = vpop.xlane.xlu0 %558
    %v561 = vlaneseq
    %v562 = vshrl.u32 %v561, 7
    %v563 = vsub.s32 0, %v562
    %v564 = vrot.slane %v559, %v563
    %v565 = vlaneseq
    %v566 = vshrl.u32 %v565, 7
    %v567 = vsub.s32 1, %v566
    %v568 = vrot.slane %v559, %v567
    %v569 = vlaneseq
    %v570 = vshrl.u32 %v569, 7
    %v571 = vsub.s32 2, %v570
    %v572 = vrot.slane %v559, %v571
    %v573 = vlaneseq
    %v574 = vshrl.u32 %v573, 7
    %v575 = vsub.s32 3, %v574
    %v576 = vrot.slane %v559, %v575
    %v577 = vlaneseq
    %v578 = vshrl.u32 %v577, 7
    %v579 = vsub.s32 4, %v578
    %v580 = vrot.slane %v559, %v579
    %v581 = vlaneseq
    %v582 = vshrl.u32 %v581, 7
    %v583 = vsub.s32 5, %v582
    %v584 = vrot.slane %v559, %v583
    %v585 = vlaneseq
    %v586 = vshrl.u32 %v585, 7
    %v587 = vsub.s32 6, %v586
    %v588 = vrot.slane %v559, %v587
    %v589 = vlaneseq
    %v590 = vshrl.u32 %v589, 7
    %v591 = vsub.s32 7, %v590
    %v592 = vrot.slane %v559, %v591
    %v601 = vrcp.pop %v564
    %v602 = vmul.f32 %v470, %v601
    %v603 = vrcp.pop %v568
    %v604 = vmul.f32 %v472, %v603
    %v605 = vrcp.pop %v572
    %v606 = vmul.f32 %v474, %v605
    %v607 = vrcp.pop %v576
    %v608 = vmul.f32 %v476, %v607
    %v609 = vrcp.pop %v580
    %v610 = vmul.f32 %v478, %v609
    %v611 = vrcp.pop %v584
    %v612 = vmul.f32 %v480, %v611
    %v613 = vrcp.pop %v588
    %v614 = vmul.f32 %v482, %v613
    %v615 = vrcp.pop %v592
    %v616 = vmul.f32 %v484, %v615
    %625 = vset.pattern.permute.xlu0 0
    %626 = vperm.xlu0 %625, %v602
    %v627 = vpop.permute.xlu0 %626
    %628 = vset.pattern.permute.xlu0 0
    %629 = vperm.xlu0 %628, %v604
    %v630 = vpop.permute.xlu0 %629
    %631 = vset.pattern.permute.xlu0 0
    %632 = vperm.xlu0 %631, %v606
    %v633 = vpop.permute.xlu0 %632
    %634 = vset.pattern.permute.xlu0 0
    %635 = vperm.xlu0 %634, %v608
    %v636 = vpop.permute.xlu0 %635
    %637 = vset.pattern.permute.xlu0 0
    %638 = vperm.xlu0 %637, %v610
    %v639 = vpop.permute.xlu0 %638
    %640 = vset.pattern.permute.xlu0 0
    %641 = vperm.xlu0 %640, %v612
    %v642 = vpop.permute.xlu0 %641
    %643 = vset.pattern.permute.xlu0 0
    %644 = vperm.xlu0 %643, %v614
    %v645 = vpop.permute.xlu0 %644
    %646 = vset.pattern.permute.xlu0 0
    %647 = vperm.xlu0 %646, %v616
    %v648 = vpop.permute.xlu0 %647
    %v649 = vlaneseq
    %v650 = vshrl.u32 %v649, 7
    %v651 = vsub.s32 %v368, %v650
    %v652 = vrot.slane %v627, %v651
    %v653 = vlaneseq
    %v654 = vshrl.u32 %v653, 7
    %v655 = vsub.s32 %v368, %v654
    %v656 = vrot.slane %v630, %v655
    %v657 = vlaneseq
    %v658 = vshrl.u32 %v657, 7
    %v659 = vsub.s32 %v368, %v658
    %v660 = vrot.slane %v633, %v659
    %v661 = vlaneseq
    %v662 = vshrl.u32 %v661, 7
    %v663 = vsub.s32 %v368, %v662
    %v664 = vrot.slane %v636, %v663
    %v665 = vlaneseq
    %v666 = vshrl.u32 %v665, 7
    %v667 = vsub.s32 %v368, %v666
    %v668 = vrot.slane %v639, %v667
    %v669 = vlaneseq
    %v670 = vshrl.u32 %v669, 7
    %v671 = vsub.s32 %v368, %v670
    %v672 = vrot.slane %v642, %v671
    %v673 = vlaneseq
    %v674 = vshrl.u32 %v673, 7
    %v675 = vsub.s32 %v368, %v674
    %v676 = vrot.slane %v645, %v675
    %v677 = vlaneseq
    %v678 = vshrl.u32 %v677, 7
    %v679 = vsub.s32 %v368, %v678
    %v680 = vrot.slane %v648, %v679
    %v681 = vsel %vm401, %v656, %v652
    %v682 = vsel %vm403, %v660, %v681
    %v683 = vsel %vm405, %v664, %v682
    %v684 = vsel %vm407, %v668, %v683
    %v685 = vsel %vm409, %v672, %v684
    %v686 = vsel %vm411, %v676, %v685
    %v687 = vsel %vm413, %v680, %v686
    %689 = vst.msk [vmem:[#allocation2] sm:$0xff] %vm416, %v687
    // Predicated region
    $region26: #{tpu_custom_call.1} parent=1 // pred_check
      _
    $region27: #{tpu_custom_call.1} parent=1 // pred_check_branch
      %691 = sbr.rel (0) target = $region29
    $region28: #{tpu_custom_call.1} parent=1 // pred_region
      %s693 = ssub.s32 128, 128
      %694 = vsyncadd [#allocation3], %s693
      %s696 = sshll.u32 [#allocation2], 4
      %s697 = int_to_ptr.vmem [resolvable:$true] %s696
      %699 = dma.vmem_to_hbm [thread:$0]  %s697, 128, %s6, [#allocation3]
    $region29: #{tpu_custom_call.1} parent=1 // pred_fallthru
      _
    // Predicated region
    $region30: #{tpu_custom_call.1} parent=1 // pred_check
      _
    $region31: #{tpu_custom_call.1} parent=1 // pred_check_branch
      %701 = sbr.rel (0) target = $region33
    $region32: #{tpu_custom_call.1} parent=1 // pred_region
      %702 = dma.done [#allocation3], 128
    $region33: #{tpu_custom_call.1} parent=1 // pred_fallthru
      _
    %703 = vsyncpa [#allocation3], 1

// kernel: tpu_custom_call.1
$region0: #{tpu_custom_call.1}
  #allocation0 [shape = 'u32[]', space=smem, size = 0x4, offset = 0x4, fixed_abs, tag = 'smem constant byte address 0x4 - core index']
  #allocation1 [shape = 'u32[144,128]{1,0:T(1,128)}', space=vmem, size = 0x12000, scoped, tag = 'internal scratch']
  %s0 = inlined_call_operand.vmem [shape: bf16[8,32], index: 0, kind: input, shape index: {}]
  %s1 = inlined_call_operand.vmem [shape: bf16[64,32], index: 1, kind: input, shape index: {}]
  %s2 = inlined_call_operand.vmem [shape: bf16[32,32], index: 2, kind: input, shape index: {}]
  %s3 = inlined_call_operand.vmem [shape: bf16[32,32], index: 3, kind: input, shape index: {}]
  %s4 = inlined_call_operand.vmem [shape: f32[1,32], index: 4, kind: input, shape index: {}]
  %s5 = inlined_call_operand.vmem [shape: f32[1,32], index: 5, kind: input, shape index: {}]
  %s6 = inlined_call_operand.hbm [shape: f32[8,8], index: 6, kind: output, shape index: {}]
  %s7 = sld [smem:[#allocation0]]
  $region34: #{tpu_custom_call.1} parent=0
    _
  %s9 = ssub.s32 1, %s7
  %s10 = scalar_select 0, %s9, %s7
  $region1: #{tpu_custom_call.1} parent=0
    #allocation2 [shape = 'u8[4096]{0}', space=vmem, size = 0x1000, scoped, tag = 'output window, operand 0, single buffered']
    #allocation3 [shape = 's32[1]{0}', space=sflag, size = 0x4, scoped, tag = 'scoped memory for tpu_custom_call.1']
    %11 = vsyncpa [#allocation3], 0
    // Predicated region
    $region2: #{tpu_custom_call.1} parent=1 // pred_check
      _
    $region3: #{tpu_custom_call.1} parent=1 // pred_check_branch
      %13 = sbr.rel (0) target = $region5
    $region4: #{tpu_custom_call.1} parent=1 // pred_region
      _
    $region5: #{tpu_custom_call.1} parent=1 // pred_fallthru
      _
    // Predicated region
    $region6: #{tpu_custom_call.1} parent=1 // pred_check
      _
    $region7: #{tpu_custom_call.1} parent=1 // pred_check_branch
      %15 = sbr.rel (0) target = $region9
    $region8: #{tpu_custom_call.1} parent=1 // pred_region
      _
    $region9: #{tpu_custom_call.1} parent=1 // pred_fallthru
      _
    // Predicated region
    $region10: #{tpu_custom_call.1} parent=1 // pred_check
      _
    $region11: #{tpu_custom_call.1} parent=1 // pred_check_branch
      %17 = sbr.rel (0) target = $region13
    $region12: #{tpu_custom_call.1} parent=1 // pred_region
      _
    $region13: #{tpu_custom_call.1} parent=1 // pred_fallthru
      _
    // Predicated region
    $region14: #{tpu_custom_call.1} parent=1 // pred_check
      _
    $region15: #{tpu_custom_call.1} parent=1 // pred_check_branch
      %19 = sbr.rel (0) target = $region17
    $region16: #{tpu_custom_call.1} parent=1 // pred_region
      _
    $region17: #{tpu_custom_call.1} parent=1 // pred_fallthru
      _
    // Predicated region
    $region18: #{tpu_custom_call.1} parent=1 // pred_check
      _
    $region19: #{tpu_custom_call.1} parent=1 // pred_check_branch
      %21 = sbr.rel (0) target = $region21
    $region20: #{tpu_custom_call.1} parent=1 // pred_region
      _
    $region21: #{tpu_custom_call.1} parent=1 // pred_fallthru
      _
    // Predicated region
    $region22: #{tpu_custom_call.1} parent=1 // pred_check
      _
    $region23: #{tpu_custom_call.1} parent=1 // pred_check_branch
      %23 = sbr.rel (0) target = $region25
    $region24: #{tpu_custom_call.1} parent=1 // pred_region
      _
    $region25: #{tpu_custom_call.1} parent=1 // pred_fallthru
      _
    %v25 = vld [vmem:[%s0] sm:$0xf]
    %v26 = vld [vmem:[%s2] sm:$0xf]
    %v27 = vld [vmem:[%s2 + $0x4] sm:$0xf]
    %v28 = vld [vmem:[%s2 + $0x8] sm:$0xf]
    %v29 = vld [vmem:[%s2 + $0xc] sm:$0xf]
    %v30 = vld [vmem:[%s4] sm:$0x1]
    %v32 = vlaneseq
    %v33 = vshrl.u32 %v32, 7
    %v34 = vsub.s32 0, %v33
    %v35 = vrot.slane %v30, %v34
    %v41 = vunpack.c.l.b16 %v26
    %v42 = vunpack.c.l.b16 %v27
    %v43 = vunpack.c.l.b16 %v28
    %v44 = vunpack.c.l.b16 %v29
    %v45 = vpack.c.b16 %v42, %v41
    %v46 = vpack.c.b16 %v44, %v43
    %vm49 = vcmask 261120
    %v51 = vsel %vm49, %v25, 0
    %53 = vmatprep.subr.bf16.mxu0 0
    %54 = vmatpush1.bf16.msra.mxu0 %v45
    %55 = vmatprep.subr.bf16.mxu0 0
    %56 = vmatpush1.bf16.msra.mxu0 %v46
    %57 = vmatprep.subr.bf16.mxu0 0
    %58 = vmatpush1.bf16.msra.mxu0 0
    %59 = vmatprep.subr.bf16.mxu0 0
    %60 = vmatpush1.bf16.msra.mxu0 0
    %61 = vmatprep.subr.bf16.mxu0 0
    %62 = vmatpush1.bf16.msra.mxu0 0
    %63 = vmatprep.subr.bf16.mxu0 0
    %64 = vmatpush1.bf16.msra.mxu0 0
    %65 = vmatprep.subr.bf16.mxu0 0
    %66 = vmatpush1.bf16.msra.mxu0 0
    %67 = vmatprep.subr.bf16.mxu0 0
    %68 = vmatpush1.bf16.msra.mxu0 0
    %69 = vmatprep.subr.bf16.mxu0 0
    %70 = vmatpush1.bf16.msra.mxu0 0
    %71 = vmatprep.subr.bf16.mxu0 0
    %72 = vmatpush1.bf16.msra.mxu0 0
    %73 = vmatprep.subr.bf16.mxu0 0
    %74 = vmatpush1.bf16.msra.mxu0 0
    %75 = vmatprep.subr.bf16.mxu0 0
    %76 = vmatpush1.bf16.msra.mxu0 0
    %77 = vmatprep.subr.bf16.mxu0 0
    %78 = vmatpush1.bf16.msra.mxu0 0
    %79 = vmatprep.subr.bf16.mxu0 0
    %80 = vmatpush1.bf16.msra.mxu0 0
    %81 = vmatprep.subr.bf16.mxu0 0
    %82 = vmatpush1.bf16.msra.mxu0 0
    %83 = vmatprep.subr.bf16.mxu0 0
    %84 = vmatpush1.bf16.msra.mxu0 0
    %85 = vmatprep.mubr.bf16.mxu0 0
    %86 = vmatmul.mubr.bf16.gmra.mrb[0].mxu0 %v51
    %v87 = vpop.f32.mrb[0].mxu0
    %v88 = vadd.f32 %v35, %v87
    %v89 = vpop.f32.mrb[0].mxu0
    %v90 = vpop.f32.mrb[0].mxu0
    %v91 = vpop.f32.mrb[0].mxu0
    %92 = vdwg.mxu0
    %v93 = vld [vmem:[%s1] sm:$0xf]
    %v94 = vld [vmem:[%s1 + $0x4] sm:$0xf]
    %v95 = vld [vmem:[%s1 + $0x8] sm:$0xf]
    %v96 = vld [vmem:[%s1 + $0xc] sm:$0xf]
    %v97 = vld [vmem:[%s1 + $0x10] sm:$0xf]
    %v98 = vld [vmem:[%s1 + $0x14] sm:$0xf]
    %v99 = vld [vmem:[%s1 + $0x18] sm:$0xf]
    %v100 = vld [vmem:[%s1 + $0x1c] sm:$0xf]
    %v101 = vld [vmem:[%s3] sm:$0xf]
    %v102 = vld [vmem:[%s3 + $0x4] sm:$0xf]
    %v103 = vld [vmem:[%s3 + $0x8] sm:$0xf]
    %v104 = vld [vmem:[%s3 + $0xc] sm:$0xf]
    %v113 = vunpack.c.l.b16 %v93
    %v114 = vunpack.c.l.b16 %v94
    %v115 = vunpack.c.l.b16 %v95
    %v116 = vunpack.c.l.b16 %v96
    %v117 = vunpack.c.l.b16 %v97
    %v118 = vunpack.c.l.b16 %v98
    %v119 = vunpack.c.l.b16 %v99
    %v120 = vunpack.c.l.b16 %v100
    %v121 = vpack.c.b16 %v114, %v113
    %v122 = vpack.c.b16 %v116, %v115
    %v123 = vpack.c.b16 %v118, %v117
    %v124 = vpack.c.b16 %v120, %v119
    %v129 = vunpack.c.l.b16 %v101
    %v130 = vunpack.c.l.b16 %v102
    %v131 = vunpack.c.l.b16 %v103
    %v132 = vunpack.c.l.b16 %v104
    %v133 = vpack.c.b16 %v130, %v129
    %v134 = vpack.c.b16 %v132, %v131
    %v138 = vsel %vm49, %v121, 0
    %v141 = vsel %vm49, %v122, 0
    %v144 = vsel %vm49, %v123, 0
    %v147 = vsel %vm49, %v124, 0
    %149 = vmatprep.subr.bf16.mxu0 0
    %150 = vmatpush1.bf16.msra.mxu0 %v133
    %151 = vmatprep.subr.bf16.mxu0 0
    %152 = vmatpush1.bf16.msra.mxu0 %v134
    %153 = vmatprep.subr.bf16.mxu0 0
    %154 = vmatpush1.bf16.msra.mxu0 0
    %155 = vmatprep.subr.bf16.mxu0 0
    %156 = vmatpush1.bf16.msra.mxu0 0
    %157 = vmatprep.subr.bf16.mxu0 0
    %158 = vmatpush1.bf16.msra.mxu0 0
    %159 = vmatprep.subr.bf16.mxu0 0
    %160 = vmatpush1.bf16.msra.mxu0 0
    %161 = vmatprep.subr.bf16.mxu0 0
    %162 = vmatpush1.bf16.msra.mxu0 0
    %163 = vmatprep.subr.bf16.mxu0 0
    %164 = vmatpush1.bf16.msra.mxu0 0
    %165 = vmatprep.subr.bf16.mxu0 0
    %166 = vmatpush1.bf16.msra.mxu0 0
    %167 = vmatprep.subr.bf16.mxu0 0
    %168 = vmatpush1.bf16.msra.mxu0 0
    %169 = vmatprep.subr.bf16.mxu0 0
    %170 = vmatpush1.bf16.msra.mxu0 0
    %171 = vmatprep.subr.bf16.mxu0 0
    %172 = vmatpush1.bf16.msra.mxu0 0
    %173 = vmatprep.subr.bf16.mxu0 0
    %174 = vmatpush1.bf16.msra.mxu0 0
    %175 = vmatprep.subr.bf16.mxu0 0
    %176 = vmatpush1.bf16.msra.mxu0 0
    %177 = vmatprep.subr.bf16.mxu0 0
    %178 = vmatpush1.bf16.msra.mxu0 0
    %179 = vmatprep.subr.bf16.mxu0 0
    %180 = vmatpush1.bf16.msra.mxu0 0
    %181 = vmatprep.mubr.bf16.mxu0 0
    %182 = vmatmul.mubr.bf16.gmra.mrb[0].mxu0 %v138
    %v183 = vpop.f32.mrb[0].mxu0
    %v184 = vadd.f32 0.0, %v183
    %v185 = vpop.f32.mrb[0].mxu0
    %v186 = vpop.f32.mrb[0].mxu0
    %v187 = vadd.f32 0.0, %v186
    %v188 = vpop.f32.mrb[0].mxu0
    %189 = vmatprep.mubr.bf16.mxu0 0
    %190 = vmatmul.mubr.bf16.gmra.mrb[0].mxu0 %v141
    %v191 = vpop.f32.mrb[0].mxu0
    %v192 = vadd.f32 0.0, %v191
    %v193 = vpop.f32.mrb[0].mxu0
    %v194 = vpop.f32.mrb[0].mxu0
    %v195 = vadd.f32 0.0, %v194
    %v196 = vpop.f32.mrb[0].mxu0
    %197 = vmatprep.mubr.bf16.mxu0 0
    %198 = vmatmul.mubr.bf16.gmra.mrb[0].mxu0 %v144
    %v199 = vpop.f32.mrb[0].mxu0
    %v200 = vadd.f32 0.0, %v199
    %v201 = vpop.f32.mrb[0].mxu0
    %v202 = vpop.f32.mrb[0].mxu0
    %v203 = vadd.f32 0.0, %v202
    %v204 = vpop.f32.mrb[0].mxu0
    %205 = vmatprep.mubr.bf16.mxu0 0
    %206 = vmatmul.mubr.bf16.gmra.mrb[0].mxu0 %v147
    %v207 = vpop.f32.mrb[0].mxu0
    %v208 = vadd.f32 0.0, %v207
    %v209 = vpop.f32.mrb[0].mxu0
    %v210 = vpop.f32.mrb[0].mxu0
    %v211 = vadd.f32 0.0, %v210
    %v212 = vpop.f32.mrb[0].mxu0
    %213 = vdwg.mxu0
    %v215 = vcombine.high %v88, %v88
    %v217 = vunpack.c.l.s4 1966171168
    %v218 = vunpack.c.0.s8 %v217
    %v219 = vlaneseq
    %v220 = vshrl.u32 %v219, 7
    %v221 = vsub.s32 %v218, %v220
    %v222 = vrot.slane %v88, %v221
    %v224 = vunpack.c.l.s4 1966171168
    %v225 = vunpack.c.0.s8 %v224
    %v226 = vlaneseq
    %v227 = vshrl.u32 %v226, 7
    %v228 = vsub.s32 %v225, %v227
    %v229 = vrot.slane %v215, %v228
    %v230 = vcombine.high %v222, %v222
    %v231 = vcombine.high %v229, %v229
    %v233 = vunpack.c.l.s4 1966171168
    %v234 = vunpack.c.0.s8 %v233
    %v235 = vlaneseq
    %v236 = vshrl.u32 %v235, 7
    %v237 = vsub.s32 %v234, %v236
    %v238 = vrot.slane %v222, %v237
    %v240 = vunpack.c.l.s4 1966171168
    %v241 = vunpack.c.0.s8 %v240
    %v242 = vlaneseq
    %v243 = vshrl.u32 %v242, 7
    %v244 = vsub.s32 %v241, %v243
    %v245 = vrot.slane %v229, %v244
    %v247 = vunpack.c.l.s4 1966171168
    %v248 = vunpack.c.0.s8 %v247
    %v249 = vlaneseq
    %v250 = vshrl.u32 %v249, 7
    %v251 = vsub.s32 %v248, %v250
    %v252 = vrot.slane %v230, %v251
    %v254 = vunpack.c.l.s4 1966171168
    %v255 = vunpack.c.0.s8 %v254
    %v256 = vlaneseq
    %v257 = vshrl.u32 %v256, 7
    %v258 = vsub.s32 %v255, %v257
    %v259 = vrot.slane %v231, %v258
    %v260 = vcombine.high %v238, %v238
    %v261 = vcombine.high %v245, %v245
    %v262 = vcombine.high %v252, %v252
    %v263 = vcombine.high %v259, %v259
    %v264 = vlaneseq
    %v265 = vshrl.u32 %v264, 7
    %v266 = vsub.s32 0, %v265
    %v267 = vrot.slane %v238, %v266
    %v268 = vlaneseq
    %v269 = vshrl.u32 %v268, 7
    %v270 = vsub.s32 0, %v269
    %v271 = vrot.slane %v252, %v270
    %v272 = vlaneseq
    %v273 = vshrl.u32 %v272, 7
    %v274 = vsub.s32 0, %v273
    %v275 = vrot.slane %v260, %v274
    %v276 = vlaneseq
    %v277 = vshrl.u32 %v276, 7
    %v278 = vsub.s32 0, %v277
    %v279 = vrot.slane %v262, %v278
    %v280 = vlaneseq
    %v281 = vshrl.u32 %v280, 7
    %v282 = vsub.s32 0, %v281
    %v283 = vrot.slane %v245, %v282
    %v284 = vlaneseq
    %v285 = vshrl.u32 %v284, 7
    %v286 = vsub.s32 0, %v285
    %v287 = vrot.slane %v259, %v286
    %v288 = vlaneseq
    %v289 = vshrl.u32 %v288, 7
    %v290 = vsub.s32 0, %v289
    %v291 = vrot.slane %v261, %v290
    %v292 = vlaneseq
    %v293 = vshrl.u32 %v292, 7
    %v294 = vsub.s32 0, %v293
    %v295 = vrot.slane %v263, %v294
    %v304 = vadd.f32 %v184, %v267
    %v305 = vadd.f32 %v187, %v271
    %v306 = vadd.f32 %v192, %v275
    %v307 = vadd.f32 %v195, %v279
    %v308 = vadd.f32 %v200, %v283
    %v309 = vadd.f32 %v203, %v287
    %v310 = vadd.f32 %v208, %v291
    %v311 = vadd.f32 %v211, %v295
    %v312 = vtanh.pop %v304
    %v313 = vtanh.pop %v305
    %v314 = vtanh.pop %v306
    %v315 = vtanh.pop %v307
    %v316 = vtanh.pop %v308
    %v317 = vtanh.pop %v309
    %v318 = vtanh.pop %v310
    %v319 = vtanh.pop %v311
    %v320 = vld [vmem:[%s5] sm:$0x1]
    %v322 = vlaneseq
    %v323 = vshrl.u32 %v322, 7
    %v324 = vsub.s32 0, %v323
    %v325 = vrot.slane %v320, %v324
    %v327 = vmul.f32 %v312, %v325
    %v328 = vmul.f32 %v313, %v325
    %v329 = vmul.f32 %v314, %v325
    %v330 = vmul.f32 %v315, %v325
    %v331 = vmul.f32 %v316, %v325
    %v332 = vmul.f32 %v317, %v325
    %v333 = vmul.f32 %v318, %v325
    %v334 = vmul.f32 %v319, %v325
    %v335 = vsel %vm49, %v327, 0.0
    %336 = vadd.xlane.f32.xlu0 %v335
    %v337 = vpop.xlane.xlu0 %336
    %v338 = vsel %vm49, %v328, 0.0
    %339 = vadd.xlane.f32.xlu0 %v338
    %v340 = vpop.xlane.xlu0 %339
    %v341 = vsel %vm49, %v329, 0.0
    %342 = vadd.xlane.f32.xlu0 %v341
    %v343 = vpop.xlane.xlu0 %342
    %v344 = vsel %vm49, %v330, 0.0
    %345 = vadd.xlane.f32.xlu0 %v344
    %v346 = vpop.xlane.xlu0 %345
    %v347 = vsel %vm49, %v331, 0.0
    %348 = vadd.xlane.f32.xlu0 %v347
    %v349 = vpop.xlane.xlu0 %348
    %v350 = vsel %vm49, %v332, 0.0
    %351 = vadd.xlane.f32.xlu0 %v350
    %v352 = vpop.xlane.xlu0 %351
    %v353 = vsel %vm49, %v333, 0.0
    %354 = vadd.xlane.f32.xlu0 %v353
    %v355 = vpop.xlane.xlu0 %354
    %v356 = vsel %vm49, %v334, 0.0
    %357 = vadd.xlane.f32.xlu0 %v356
    %v358 = vpop.xlane.xlu0 %357
    %v367 = vlaneseq
    %v368 = vand.u32 %v367, 127
    %v369 = vlaneseq
    %v370 = vshrl.u32 %v369, 7
    %v371 = vsub.s32 %v368, %v370
    %v372 = vrot.slane %v337, %v371
    %v373 = vlaneseq
    %v374 = vshrl.u32 %v373, 7
    %v375 = vsub.s32 %v368, %v374
    %v376 = vrot.slane %v340, %v375
    %v377 = vlaneseq
    %v378 = vshrl.u32 %v377, 7
    %v379 = vsub.s32 %v368, %v378
    %v380 = vrot.slane %v343, %v379
    %v381 = vlaneseq
    %v382 = vshrl.u32 %v381, 7
    %v383 = vsub.s32 %v368, %v382
    %v384 = vrot.slane %v346, %v383
    %v385 = vlaneseq
    %v386 = vshrl.u32 %v385, 7
    %v387 = vsub.s32 %v368, %v386
    %v388 = vrot.slane %v349, %v387
    %v389 = vlaneseq
    %v390 = vshrl.u32 %v389, 7
    %v391 = vsub.s32 %v368, %v390
    %v392 = vrot.slane %v352, %v391
    %v393 = vlaneseq
    %v394 = vshrl.u32 %v393, 7
    %v395 = vsub.s32 %v368, %v394
    %v396 = vrot.slane %v355, %v395
    %v397 = vlaneseq
    %v398 = vshrl.u32 %v397, 7
    %v399 = vsub.s32 %v368, %v398
    %v400 = vrot.slane %v358, %v399
    %vm401 = vcmask 1041409
    %v402 = vsel %vm401, %v376, %v372
    %vm403 = vcmask 1042434
    %v404 = vsel %vm403, %v380, %v402
    %vm405 = vcmask 1043459
    %v406 = vsel %vm405, %v384, %v404
    %vm407 = vcmask 1044484
    %v408 = vsel %vm407, %v388, %v406
    %vm409 = vcmask 1045509
    %v410 = vsel %vm409, %v392, %v408
    %vm411 = vcmask 1046534
    %v412 = vsel %vm411, %v396, %v410
    %vm413 = vcmask 1047559
    %v414 = vsel %vm413, %v400, %v412
    %vm416 = vcmask 64512
    %v417 = vsel %vm416, %v414, -inf
    %418 = vmax.xlane.f32.xlu0 %v417
    %v419 = vpop.xlane.xlu0 %418
    %v421 = vlaneseq
    %v422 = vshrl.u32 %v421, 7
    %v423 = vsub.s32 0, %v422
    %v424 = vrot.slane %v419, %v423
    %v425 = vlaneseq
    %v426 = vshrl.u32 %v425, 7
    %v427 = vsub.s32 1, %v426
    %v428 = vrot.slane %v419, %v427
    %v429 = vlaneseq
    %v430 = vshrl.u32 %v429, 7
    %v431 = vsub.s32 2, %v430
    %v432 = vrot.slane %v419, %v431
    %v433 = vlaneseq
    %v434 = vshrl.u32 %v433, 7
    %v435 = vsub.s32 3, %v434
    %v436 = vrot.slane %v419, %v435
    %v437 = vlaneseq
    %v438 = vshrl.u32 %v437, 7
    %v439 = vsub.s32 4, %v438
    %v440 = vrot.slane %v419, %v439
    %v441 = vlaneseq
    %v442 = vshrl.u32 %v441, 7
    %v443 = vsub.s32 5, %v442
    %v444 = vrot.slane %v419, %v443
    %v445 = vlaneseq
    %v446 = vshrl.u32 %v445, 7
    %v447 = vsub.s32 6, %v446
    %v448 = vrot.slane %v419, %v447
    %v449 = vlaneseq
    %v450 = vshrl.u32 %v449, 7
    %v451 = vsub.s32 7, %v450
    %v452 = vrot.slane %v419, %v451
    %v461 = vsub.f32 %v337, %v424
    %v462 = vsub.f32 %v340, %v428
    %v463 = vsub.f32 %v343, %v432
    %v464 = vsub.f32 %v346, %v436
    %v465 = vsub.f32 %v349, %v440
    %v466 = vsub.f32 %v352, %v444
    %v467 = vsub.f32 %v355, %v448
    %v468 = vsub.f32 %v358, %v452
    %v469 = vmul.f32 %v461, 1.442695
    %v470 = vpow.pop %v469
    %v471 = vmul.f32 %v462, 1.442695
    %v472 = vpow.pop %v471
    %v473 = vmul.f32 %v463, 1.442695
    %v474 = vpow.pop %v473
    %v475 = vmul.f32 %v464, 1.442695
    %v476 = vpow.pop %v475
    %v477 = vmul.f32 %v465, 1.442695
    %v478 = vpow.pop %v477
    %v479 = vmul.f32 %v466, 1.442695
    %v480 = vpow.pop %v479
    %v481 = vmul.f32 %v467, 1.442695
    %v482 = vpow.pop %v481
    %v483 = vmul.f32 %v468, 1.442695
    %v484 = vpow.pop %v483
    %493 = vset.pattern.permute.xlu0 0
    %494 = vperm.xlu0 %493, %v470
    %v495 = vpop.permute.xlu0 %494
    %496 = vset.pattern.permute.xlu0 0
    %497 = vperm.xlu0 %496, %v472
    %v498 = vpop.permute.xlu0 %497
    %499 = vset.pattern.permute.xlu0 0
    %500 = vperm.xlu0 %499, %v474
    %v501 = vpop.permute.xlu0 %500
    %502 = vset.pattern.permute.xlu0 0
    %503 = vperm.xlu0 %502, %v476
    %v504 = vpop.permute.xlu0 %503
    %505 = vset.pattern.permute.xlu0 0
    %506 = vperm.xlu0 %505, %v478
    %v507 = vpop.permute.xlu0 %506
    %508 = vset.pattern.permute.xlu0 0
    %509 = vperm.xlu0 %508, %v480
    %v510 = vpop.permute.xlu0 %509
    %511 = vset.pattern.permute.xlu0 0
    %512 = vperm.xlu0 %511, %v482
    %v513 = vpop.permute.xlu0 %512
    %514 = vset.pattern.permute.xlu0 0
    %515 = vperm.xlu0 %514, %v484
    %v516 = vpop.permute.xlu0 %515
    %v517 = vlaneseq
    %v518 = vshrl.u32 %v517, 7
    %v519 = vsub.s32 %v368, %v518
    %v520 = vrot.slane %v495, %v519
    %v521 = vlaneseq
    %v522 = vshrl.u32 %v521, 7
    %v523 = vsub.s32 %v368, %v522
    %v524 = vrot.slane %v498, %v523
    %v525 = vlaneseq
    %v526 = vshrl.u32 %v525, 7
    %v527 = vsub.s32 %v368, %v526
    %v528 = vrot.slane %v501, %v527
    %v529 = vlaneseq
    %v530 = vshrl.u32 %v529, 7
    %v531 = vsub.s32 %v368, %v530
    %v532 = vrot.slane %v504, %v531
    %v533 = vlaneseq
    %v534 = vshrl.u32 %v533, 7
    %v535 = vsub.s32 %v368, %v534
    %v536 = vrot.slane %v507, %v535
    %v537 = vlaneseq
    %v538 = vshrl.u32 %v537, 7
    %v539 = vsub.s32 %v368, %v538
    %v540 = vrot.slane %v510, %v539
    %v541 = vlaneseq
    %v542 = vshrl.u32 %v541, 7
    %v543 = vsub.s32 %v368, %v542
    %v544 = vrot.slane %v513, %v543
    %v545 = vlaneseq
    %v546 = vshrl.u32 %v545, 7
    %v547 = vsub.s32 %v368, %v546
    %v548 = vrot.slane %v516, %v547
    %v549 = vsel %vm401, %v524, %v520
    %v550 = vsel %vm403, %v528, %v549
    %v551 = vsel %vm405, %v532, %v550
    %v552 = vsel %vm407, %v536, %v551
    %v553 = vsel %vm409, %v540, %v552
    %v554 = vsel %vm411, %v544, %v553
    %v555 = vsel %vm413, %v548, %v554
    %v557 = vsel %vm416, %v555, 0.0
    %558 = vadd.xlane.f32.xlu0 %v557
    %v559 = vpop.xlane.xlu0 %558
    %v561 = vlaneseq
    %v562 = vshrl.u32 %v561, 7
    %v563 = vsub.s32 0, %v562
    %v564 = vrot.slane %v559, %v563
    %v565 = vlaneseq
    %v566 = vshrl.u32 %v565, 7
    %v567 = vsub.s32 1, %v566
    %v568 = vrot.slane %v559, %v567
    %v569 = vlaneseq
    %v570 = vshrl.u32 %v569, 7
    %v571 = vsub.s32 2, %v570
    %v572 = vrot.slane %v559, %v571
    %v573 = vlaneseq
    %v574 = vshrl.u32 %v573, 7
    %v575 = vsub.s32 3, %v574
    %v576 = vrot.slane %v559, %v575
    %v577 = vlaneseq
    %v578 = vshrl.u32 %v577, 7
    %v579 = vsub.s32 4, %v578
    %v580 = vrot.slane %v559, %v579
    %v581 = vlaneseq
    %v582 = vshrl.u32 %v581, 7
    %v583 = vsub.s32 5, %v582
    %v584 = vrot.slane %v559, %v583
    %v585 = vlaneseq
    %v586 = vshrl.u32 %v585, 7
    %v587 = vsub.s32 6, %v586
    %v588 = vrot.slane %v559, %v587
    %v589 = vlaneseq
    %v590 = vshrl.u32 %v589, 7
    %v591 = vsub.s32 7, %v590
    %v592 = vrot.slane %v559, %v591
    %v601 = vrcp.pop %v564
    %v602 = vmul.f32 %v470, %v601
    %v603 = vrcp.pop %v568
    %v604 = vmul.f32 %v472, %v603
    %v605 = vrcp.pop %v572
    %v606 = vmul.f32 %v474, %v605
    %v607 = vrcp.pop %v576
    %v608 = vmul.f32 %v476, %v607
    %v609 = vrcp.pop %v580
    %v610 = vmul.f32 %v478, %v609
    %v611 = vrcp.pop %v584
    %v612 = vmul.f32 %v480, %v611
    %v613 = vrcp.pop %v588
    %v614 = vmul.f32 %v482, %v613
    %v615 = vrcp.pop %v592
    %v616 = vmul.f32 %v484, %v615
    %625 = vset.pattern.permute.xlu0 0
    %626 = vperm.xlu0 %625, %v602
    %v627 = vpop.permute.xlu0 %626
    %628 = vset.pattern.permute.xlu0 0
    %629 = vperm.xlu0 %628, %v604
    %v630 = vpop.permute.xlu0 %629
    %631 = vset.pattern.permute.xlu0 0
    %632 = vperm.xlu0 %631, %v606
    %v633 = vpop.permute.xlu0 %632
    %634 = vset.pattern.permute.xlu0 0
    %635 = vperm.xlu0 %634, %v608
    %v636 = vpop.permute.xlu0 %635
    %637 = vset.pattern.permute.xlu0 0
    %638 = vperm.xlu0 %637, %v610
    %v639 = vpop.permute.xlu0 %638
    %640 = vset.pattern.permute.xlu0 0
    %641 = vperm.xlu0 %640, %v612
    %v642 = vpop.permute.xlu0 %641
    %643 = vset.pattern.permute.xlu0 0
    %644 = vperm.xlu0 %643, %v614
    %v645 = vpop.permute.xlu0 %644
    %646 = vset.pattern.permute.xlu0 0
    %647 = vperm.xlu0 %646, %v616
    %v648 = vpop.permute.xlu0 %647
    %v649 = vlaneseq
    %v650 = vshrl.u32 %v649, 7
    %v651 = vsub.s32 %v368, %v650
    %v652 = vrot.slane %v627, %v651
    %v653 = vlaneseq
    %v654 = vshrl.u32 %v653, 7
    %v655 = vsub.s32 %v368, %v654
    %v656 = vrot.slane %v630, %v655
    %v657 = vlaneseq
    %v658 = vshrl.u32 %v657, 7
    %v659 = vsub.s32 %v368, %v658
    %v660 = vrot.slane %v633, %v659
    %v661 = vlaneseq
    %v662 = vshrl.u32 %v661, 7
    %v663 = vsub.s32 %v368, %v662
    %v664 = vrot.slane %v636, %v663
    %v665 = vlaneseq
    %v666 = vshrl.u32 %v665, 7
    %v667 = vsub.s32 %v368, %v666
    %v668 = vrot.slane %v639, %v667
    %v669 = vlaneseq
    %v670 = vshrl.u32 %v669, 7
    %v671 = vsub.s32 %v368, %v670
    %v672 = vrot.slane %v642, %v671
    %v673 = vlaneseq
    %v674 = vshrl.u32 %v673, 7
    %v675 = vsub.s32 %v368, %v674
    %v676 = vrot.slane %v645, %v675
    %v677 = vlaneseq
    %v678 = vshrl.u32 %v677, 7
    %v679 = vsub.s32 %v368, %v678
    %v680 = vrot.slane %v648, %v679
    %v681 = vsel %vm401, %v656, %v652
    %v682 = vsel %vm403, %v660, %v681
    %v683 = vsel %vm405, %v664, %v682
    %v684 = vsel %vm407, %v668, %v683
    %v685 = vsel %vm409, %v672, %v684
    %v686 = vsel %vm411, %v676, %v685
    %v687 = vsel %vm413, %v680, %v686
    %689 = vst.msk [vmem:[#allocation2] sm:$0xff] %vm416, %v687
    // Predicated region
    $region26: #{tpu_custom_call.1} parent=1 // pred_check
      _
    $region27: #{tpu_custom_call.1} parent=1 // pred_check_branch
      %691 = sbr.rel (0) target = $region29
    $region28: #{tpu_custom_call.1} parent=1 // pred_region
      %s693 = ssub.s32 128, 128
      %694 = vsyncadd [#allocation3], %s693
      %s696 = sshll.u32 [#allocation2], 4
      %s697 = int_to_ptr.vmem [resolvable:$true] %s696
      %699 = dma.vmem_to_hbm [thread:$0]  %s697, 128, %s6, [#allocation3]
    $region29: #{tpu_custom_call.1} parent=1 // pred_fallthru
      _
    // Predicated region
    $region30: #{tpu_custom_call.1} parent=1 // pred_check
      _
    $region31: #{tpu_custom_call.1} parent=1 // pred_check_branch
      %701 = sbr.rel (0) target = $region33
    $region32: #{tpu_custom_call.1} parent=1 // pred_region
      %702 = dma.done [#allocation3], 128
    $region33: #{tpu_custom_call.1} parent=1 // pred_fallthru
      _
    %703 = vsyncpa [#allocation3], 1

</llo_original>
